<compile_context>
chip_gen: v7x
topology: tpu7x:2x2x1
jax: 0.10.0
libtpu: 0.0.40
codegen_flags: <defaults>
</compile_context>

<pallas_src>
import jax
import jax.numpy as jnp
from jax.experimental import pallas as pl
from jax.experimental.pallas import tpu as pltpu

_LANE = 128            # lane width of a vreg
_DEFAULT_BLOCK_ROWS = 512   # (512, 128) f32 = 256 KiB per block buffer
_PALLAS_MIN_N = 1024   # below this, plain jnp is strictly better


def _linreg_kernel(w_ref, b_ref, x_ref, o_ref):
    # w_ref, b_ref: (1,) f32 scalars in SMEM
    # x_ref, o_ref: (block_rows, 128) f32 tiles in VMEM
    w = w_ref[0]
    b = b_ref[0]
    o_ref[...] = w * x_ref[...] + b


def linear_regression_forward(x, weights, bias, *, block_rows=_DEFAULT_BLOCK_ROWS):
    """x: (N, 1) f32, weights: (1,) f32, bias: (1,) f32 -> (N,) f32."""
    n = x.shape[0]
    xf = x.reshape(-1).astype(jnp.float32)
    w = weights.astype(jnp.float32)
    b = bias.astype(jnp.float32)

    # Tiny inputs: kernel launch overhead dwarfs the bytes moved; let XLA fuse it.
    if n < _PALLAS_MIN_N:
        return w[0] * xf + b[0]

    # Choose a block height: at most `block_rows`, at least 8 (sublane multiple),
    # never larger than needed for this input.
    rows_needed = (n + _LANE - 1) // _LANE
    block_rows = min(block_rows, max(8, ((rows_needed + 7) // 8) * 8))

    # Pad flat length to a multiple of the tile footprint -> unmasked stores,
    # no ragged last block. Reshape to a sublane+lane-dense (rows, 128) slab.
    tile_elems = block_rows * _LANE
    n_pad = ((n + tile_elems - 1) // tile_elems) * tile_elems
    if n_pad != n:
        xf = jnp.pad(xf, (0, n_pad - n))
    rows = n_pad // _LANE
    x2 = xf.reshape(rows, _LANE)

    grid = (rows // block_rows,)
    out = pl.pallas_call(
        _linreg_kernel,
        out_shape=jax.ShapeDtypeStruct((rows, _LANE), jnp.float32),
        grid=grid,
        in_specs=[
            pl.BlockSpec(memory_space=pltpu.SMEM),            # weights scalar
            pl.BlockSpec(memory_space=pltpu.SMEM),            # bias scalar
            pl.BlockSpec((block_rows, _LANE), lambda i: (i, 0)),  # x tile
        ],
        out_specs=pl.BlockSpec((block_rows, _LANE), lambda i: (i, 0)),
        compiler_params=pltpu.CompilerParams(
            dimension_semantics=("parallel",),   # lets v7x split tiles over 2 TCs
        ),
    )(w.reshape(1), b.reshape(1), x2)

    return out.reshape(n_pad)[:n]  # drop padding; matches torch output shape (N,)


if __name__ == "__main__":
    key = jax.random.PRNGKey(0)
    kw, kb, kx1, kx2 = jax.random.split(key, 4)

    # Deterministic parameter init (same shapes as nn.Parameter(torch.randn(1)))
    weights = jax.random.normal(kw, (1,), dtype=jnp.float32)
    bias = jax.random.normal(kb, (1,), dtype=jnp.float32)

    # Case 1: tiny input consistent with the toy module usage (N, 1)
    #         -> takes the plain-jnp fast path (honest optimization for small N).
    n_small = 8
    x_small = jax.random.normal(kx1, (n_small, 1), dtype=jnp.float32)
    out_small = jax.block_until_ready(linear_regression_forward(x_small, weights, bias))
    ref_small = (weights @ x_small.T + bias).reshape(n_small)
    assert out_small.shape == (n_small,)
    assert jnp.allclose(out_small, ref_small, atol=1e-6), (out_small, ref_small)

    # Case 2: larger, non-128-multiple input -> exercises the tiled Pallas kernel
    #         (padding + multi-step grid + double-buffered DMA).
    n_large = 300_000
    x_large = jax.random.normal(kx2, (n_large, 1), dtype=jnp.float32)
    out_large = jax.block_until_ready(linear_regression_forward(x_large, weights, bias))
    ref_large = weights[0] * x_large[:, 0] + bias[0]
    assert out_large.shape == (n_large,)
    assert jnp.allclose(out_large, ref_large, atol=1e-5)

    print("KERNEL_OK")
</pallas_src>

<mosaic_0001>
module attributes {stable_mosaic.version = 11 : i64} {
  func.func @_linreg_kernel(%arg0: i32, %arg1: memref<1xf32, #tpu.memory_space<smem>>, %arg2: memref<1xf32, #tpu.memory_space<smem>>, %arg3: memref<512x128xf32, #tpu.memory_space<vmem>>, %arg4: memref<512x128xf32, #tpu.memory_space<vmem>>) attributes {dimension_semantics = [#tpu.dimension_semantics<parallel>], iteration_bounds = array<i64: 5>, scalar_prefetch = 0 : i64, scratch_operands = 0 : i64, tpu.core_type = #tpu.core_type<tc>, window_params = [{transform_indices = @transform_0, window_bounds = array<i64: 1>}, {transform_indices = @transform_1, window_bounds = array<i64: 1>}, {transform_indices = @transform_2, window_bounds = array<i64: 512, 128>}, {transform_indices = @transform_3, window_bounds = array<i64: 512, 128>}]} {
    %c0 = arith.constant 0 : index
    %0 = memref.load %arg1[%c0] : memref<1xf32, #tpu.memory_space<smem>>
    %c0_0 = arith.constant 0 : index
    %1 = memref.load %arg2[%c0_0] : memref<1xf32, #tpu.memory_space<smem>>
    %c0_1 = arith.constant 0 : index
    %c0_2 = arith.constant 0 : index
    %2 = vector.load %arg3[%c0_1, %c0_2] : memref<512x128xf32, #tpu.memory_space<vmem>>, vector<512x128xf32>
    %3 = vector.broadcast %0 : f32 to vector<512x128xf32>
    %4 = arith.mulf %3, %2 : vector<512x128xf32>
    %5 = vector.broadcast %1 : f32 to vector<512x128xf32>
    %6 = arith.addf %4, %5 : vector<512x128xf32>
    %c0_3 = arith.constant 0 : index
    %c0_4 = arith.constant 0 : index
    %7 = vector.load %arg4[%c0_3, %c0_4] : memref<512x128xf32, #tpu.memory_space<vmem>>, vector<512x128xf32>
    tpu.vector_store %arg4[%c0_3, %c0_4], %6 {strides = array<i32>} : memref<512x128xf32, #tpu.memory_space<vmem>>, vector<512x128xf32>,
    return
  }
  func.func @transform_0(%arg0: i32) -> i32 {
    %c0_i32 = arith.constant 0 : i32
    %c0_i32_0 = arith.constant 0 : i32
    return %c0_i32 : i32
  }
  func.func @transform_1(%arg0: i32) -> i32 {
    %c0_i32 = arith.constant 0 : i32
    %c0_i32_0 = arith.constant 0 : i32
    return %c0_i32 : i32
  }
  func.func @transform_2(%arg0: i32) -> (i32, i32) {
    %c0_i32 = arith.constant 0 : i32
    %c0_i32_0 = arith.constant 0 : i32
    return %arg0, %c0_i32 : i32, i32
  }
  func.func @transform_3(%arg0: i32) -> (i32, i32) {
    %c0_i32 = arith.constant 0 : i32
    %c0_i32_0 = arith.constant 0 : i32
    return %arg0, %c0_i32 : i32, i32
  }
}

</mosaic_0001>

<llo_original>
// kernel: tpu_custom_call.1
$region0: #{tpu_custom_call.1}
  #allocation0 [shape = 'u32[]', space=smem, size = 0x4, offset = 0x4, fixed_abs, tag = 'smem constant byte address 0x4 - core index']
  #allocation1 [shape = 'u32[144,128]{1,0:T(1,128)}', space=vmem, size = 0x12000, scoped, tag = 'internal scratch']
  #allocation2 [shape = 'f32[1]{0:T(128)S(6)}', space=smem, size = 0x200, scoped, tag = 'scoped memory for tpu_custom_call.1']
  #allocation3 [shape = 'f32[1]{0:T(128)S(6)}', space=smem, size = 0x200, scoped, tag = 'scoped memory for tpu_custom_call.1']
  %s0 = inlined_call_operand.<no memory space> [shape: f32[1], index: 0, kind: input, shape index: {}]
  %s1 = inlined_call_operand.<no memory space> [shape: f32[1], index: 1, kind: input, shape index: {}]
  %s2 = inlined_call_operand.hbm [shape: f32[2560,128], index: 2, kind: input, shape index: {}]
  %s3 = inlined_call_operand.hbm [shape: f32[2560,128], index: 3, kind: output, shape index: {}]
  %s4 = sld [smem:[#allocation0]]
  $region49: #{tpu_custom_call.1} parent=0
    _
  %s6 = ssub.s32 1, %s4
  %s7 = scalar_select 0, %s6, %s4
  %8 = sst [smem:[#allocation2]] %s0
  %9 = sst [smem:[#allocation3]] %s1
  $region1: #{tpu_custom_call.1} parent=0
    #allocation4 [shape = 'u8[524288]{0}', space=vmem, size = 0x80000, scoped, tag = 'input window, operand 2']
    #allocation5 [shape = 's32[2]{0}', space=sflag, size = 0x8, scoped, tag = 'scoped memory for tpu_custom_call.1']
    #allocation6 [shape = 's32[2]{0}', space=sflag, size = 0x8, scoped, tag = 'scoped memory for tpu_custom_call.1']
    #allocation7 [shape = 'u8[524288]{0}', space=vmem, size = 0x80000, scoped, tag = 'output window, operand 0']
    %10 = vsyncpa [#allocation5], 0
    %s11 = scalar_lea.sflag [#allocation5], 1
    %12 = vsyncpa %s11, 0
    %13 = vsyncpa [#allocation6], 0
    %s14 = scalar_lea.sflag [#allocation6], 1
    %15 = vsyncpa %s14, 0
    loop: start=0, step=1, limit=7
    $region2: #{tpu_custom_call.1} parent=1 // loop_pre_header
      _
    $region3: #{tpu_custom_call.1} parent=1 // loop_header
      %s17 = sphi 0, %s21
      %p18 = scmp.ge.s32.totalorder %s17, 7
      %s25 = sphi 0, %s25
      %s27 = sphi 0, %s25
      %s28 = sphi 0, %s27
      %s42 = sphi 0, %s28
      %s46 = sphi 0, %s46
      %s48 = sphi 0, %s46
      %s49 = sphi 0, %s48
      %s63 = sphi 0, %s49
      %s69 = sphi 0, %s71
      %s72 = sphi 0, %s69
      %s73 = sphi 0, %s72
      %s89 = sphi 0, %s73
      %s95 = sphi 0, %s97
      %s98 = sphi 0, %s95
      %s99 = sphi 0, %s98
      %s115 = sphi 0, %s99
    $region4: #{tpu_custom_call.1} parent=1 // loop_header_branch
      %20 = sbr.rel (%p18) target = $region8
    $region5: #{tpu_custom_call.1} parent=1 // loop_body
      %s22 = ssub.s32 %s17, 1
      %s23 = ssub.s32 %s17, 2
      %s24 = sadd.s32 %s17, 1
      %s26 = sadd.s32 %s25, 1
      %p29 = scmp.eq.s32.totalorder %s17, 4
      %p30 = scmp.ne.s32.totalorder %s25, %s27
      %p31 = scmp.eq.s32.totalorder %s17, 0
      %p32 = por %p30, %p31
      %p33 = scmp.ne.s32.totalorder %s25, %s27
      %p34 = scmp.eq.s32.totalorder %s22, 4
      %p35 = por %p33, %p34
      %p36 = scmp.ne.s32.totalorder %s27, %s28
      %p37 = scmp.eq.s32.totalorder %s22, 0
      %p38 = por %p36, %p37
      %p39 = scmp.ne.s32.totalorder %s27, %s28
      %p40 = scmp.eq.s32.totalorder %s23, 4
      %p41 = por %p39, %p40
      %p43 = scmp.ne.s32.totalorder %s28, %s42
      %p44 = scmp.eq.s32.totalorder %s23, 0
      %p45 = por %p43, %p44
      %s47 = sadd.s32 %s46, 1
      %p50 = scmp.eq.s32.totalorder %s17, 4
      %p51 = scmp.ne.s32.totalorder %s46, %s48
      %p52 = scmp.eq.s32.totalorder %s17, 0
      %p53 = por %p51, %p52
      %p54 = scmp.ne.s32.totalorder %s46, %s48
      %p55 = scmp.eq.s32.totalorder %s22, 4
      %p56 = por %p54, %p55
      %p57 = scmp.ne.s32.totalorder %s48, %s49
      %p58 = scmp.eq.s32.totalorder %s22, 0
      %p59 = por %p57, %p58
      %p60 = scmp.ne.s32.totalorder %s48, %s49
      %p61 = scmp.eq.s32.totalorder %s23, 4
      %p62 = por %p60, %p61
      %p64 = scmp.ne.s32.totalorder %s49, %s63
      %p65 = scmp.eq.s32.totalorder %s23, 0
      %p66 = por %p64, %p65
      %s67 = ssub.s32 %s17, %s24
      %p68 = scmp.eq.s32.totalorder %s67, 0
      %s70 = sadd.s32 %s69, 1
      %s71 = scalar_select %p68, %s69, %s70
      %p74 = pneg %p68
      %p75 = scmp.eq.s32.totalorder %s17, 4
      %p76 = por %p74, %p75
      %p77 = scmp.ne.s32.totalorder %s69, %s72
      %p78 = scmp.eq.s32.totalorder %s17, 0
      %p79 = por %p77, %p78
      %p80 = scmp.ne.s32.totalorder %s69, %s72
      %p81 = scmp.eq.s32.totalorder %s22, 4
      %p82 = por %p80, %p81
      %p83 = scmp.ne.s32.totalorder %s72, %s73
      %p84 = scmp.eq.s32.totalorder %s22, 0
      %p85 = por %p83, %p84
      %p86 = scmp.ne.s32.totalorder %s72, %s73
      %p87 = scmp.eq.s32.totalorder %s23, 4
      %p88 = por %p86, %p87
      %p90 = scmp.ne.s32.totalorder %s73, %s89
      %p91 = scmp.eq.s32.totalorder %s23, 0
      %p92 = por %p90, %p91
      %s93 = ssub.s32 %s17, %s24
      %p94 = scmp.eq.s32.totalorder %s93, 0
      %s96 = sadd.s32 %s95, 1
      %s97 = scalar_select %p94, %s95, %s96
      %p100 = pneg %p94
      %p101 = scmp.eq.s32.totalorder %s17, 4
      %p102 = por %p100, %p101
      %p103 = scmp.ne.s32.totalorder %s95, %s98
      %p104 = scmp.eq.s32.totalorder %s17, 0
      %p105 = por %p103, %p104
      %p106 = scmp.ne.s32.totalorder %s95, %s98
      %p107 = scmp.eq.s32.totalorder %s22, 4
      %p108 = por %p106, %p107
      %p109 = scmp.ne.s32.totalorder %s98, %s99
      %p110 = scmp.eq.s32.totalorder %s22, 0
      %p111 = por %p109, %p110
      %p112 = scmp.ne.s32.totalorder %s98, %s99
      %p113 = scmp.eq.s32.totalorder %s23, 4
      %p114 = por %p112, %p113
      %p116 = scmp.ne.s32.totalorder %s99, %s115
      %p117 = scmp.eq.s32.totalorder %s23, 0
      %p118 = por %p116, %p117
      %p119 = scmp.le.s32.totalorder 1, %s17
      %p120 = scmp.lt.s32.totalorder %s17, 6
      %p121 = pnand %p119, %p120
      %p122 = pneg %p121
      // Predicated region
      $region9: #{tpu_custom_call.1} parent=5 // pred_check
        _
      $region10: #{tpu_custom_call.1} parent=5 // pred_check_branch
        %124 = sbr.rel (%p121) target = $region12
      $region11: #{tpu_custom_call.1} parent=5 // pred_region
        %s125 = ssub.s32 %s17, 1
        // Predicated region
        $region13: #{tpu_custom_call.1} parent=11 // pred_check
          %p126 = pneg %p38
        $region14: #{tpu_custom_call.1} parent=11 // pred_check_branch
          %128 = sbr.rel (%p126) target = $region16
        $region15: #{tpu_custom_call.1} parent=11 // pred_region
          _
        $region16: #{tpu_custom_call.1} parent=11 // pred_fallthru
          _
        // Predicated region
        $region17: #{tpu_custom_call.1} parent=11 // pred_check
          %p129 = pneg %p59
        $region18: #{tpu_custom_call.1} parent=11 // pred_check_branch
          %131 = sbr.rel (%p129) target = $region20
        $region19: #{tpu_custom_call.1} parent=11 // pred_region
          _
        $region20: #{tpu_custom_call.1} parent=11 // pred_fallthru
          _
      $region12: #{tpu_custom_call.1} parent=5 // pred_fallthru
        _
      %p132 = scmp.lt.s32.totalorder %s17, 5
      // Predicated region
      $region21: #{tpu_custom_call.1} parent=5 // pred_check
        %p133 = pneg %p132
      $region22: #{tpu_custom_call.1} parent=5 // pred_check_branch
        %135 = sbr.rel (%p133) target = $region24
      $region23: #{tpu_custom_call.1} parent=5 // pred_region
        // Predicated region
        $region25: #{tpu_custom_call.1} parent=23 // pred_check
          %p136 = pneg %p79
        $region26: #{tpu_custom_call.1} parent=23 // pred_check_branch
          %138 = sbr.rel (%p136) target = $region28
        $region27: #{tpu_custom_call.1} parent=23 // pred_region
          %s139 = sand.u32 %s69, 1
          %s140 = scalar_lea.sflag [#allocation5], %s139
          %s141 = sand.u32 %s69, 1
          %s142 = smul.addr %s141, 512
          %s143 = scalar_lea.vmem [#allocation4], %s142
          %s144 = smul.u32 64, %s17
          %s146 = ssub.s32 8192, 8192
          %147 = vsyncadd %s140, %s146
          %s148 = smul.addr %s144, 128
          %s149 = scalar_lea.hbm %s2, %s148
          %s150 = sshll.u32 %s143, 4
          %s151 = int_to_ptr.vmem [resolvable:$true] %s150
          %156 = dma.hbm_to_vmem [thread:$0]  %s149, 8192, %s151, %s140, 128, 128, 8
        $region28: #{tpu_custom_call.1} parent=23 // pred_fallthru
          _
      $region24: #{tpu_custom_call.1} parent=5 // pred_fallthru
        _
      %p157 = scmp.le.s32.totalorder 1, %s17
      %p158 = scmp.lt.s32.totalorder %s17, 6
      %p159 = pnand %p157, %p158
      %p160 = pneg %p159
      // Predicated region
      $region29: #{tpu_custom_call.1} parent=5 // pred_check
        _
      $region30: #{tpu_custom_call.1} parent=5 // pred_check_branch
        %162 = sbr.rel (%p159) target = $region32
      $region31: #{tpu_custom_call.1} parent=5 // pred_region
        %s163 = ssub.s32 %s17, 1
        %s164 = sand.u32 %s72, 1
        %s165 = scalar_lea.sflag [#allocation5], %s164
        %s166 = sand.u32 %s72, 1
        %s167 = smul.addr %s166, 512
        %s168 = scalar_lea.vmem [#allocation4], %s167
        // Predicated region
        $region33: #{tpu_custom_call.1} parent=31 // pred_check
          %p169 = pneg %p85
        $region34: #{tpu_custom_call.1} parent=31 // pred_check_branch
          %171 = sbr.rel (%p169) target = $region36
        $region35: #{tpu_custom_call.1} parent=31 // pred_region
          %172 = dma.done %s165, 8192
        $region36: #{tpu_custom_call.1} parent=31 // pred_fallthru
          _
        %p173 = pneg %p38
        %p174 = pneg %p35
        %p175 = pneg %p59
        %p176 = pneg %p56
        %s177 = sand.u32 %s72, 1
        %s178 = scalar_lea.sflag [#allocation5], %s177
        %s179 = sand.u32 %s72, 1
        %s180 = smul.addr %s179, 512
        %s181 = scalar_lea.vmem [#allocation4], %s180
        %p182 = pneg %p85
        %p183 = pneg %p82
        %p184 = pneg %p111
        %p185 = pneg %p108
        %s186 = sand.u32 %s98, 1
        %s187 = scalar_lea.sflag [#allocation6], %s186
        %s188 = sand.u32 %s98, 1
        %s189 = smul.addr %s188, 512
        %s190 = scalar_lea.vmem [#allocation7], %s189
        %s191 = smul.u32 64, %s22
        %s192 = smul.u32 64, %s22
        %s193 = sld [smem:[#allocation2]]
        %s194 = sld [smem:[#allocation3]]
        %v195 = vld [vmem:[%s168] sm:$0xff]
        %v196 = vld [vmem:[%s168 + $0x8] sm:$0xff]
        %v197 = vld [vmem:[%s168 + $0x10] sm:$0xff]
        %v198 = vld [vmem:[%s168 + $0x18] sm:$0xff]
        %v199 = vld [vmem:[%s168 + $0x20] sm:$0xff]
        %v200 = vld [vmem:[%s168 + $0x28] sm:$0xff]
        %v201 = vld [vmem:[%s168 + $0x30] sm:$0xff]
        %v202 = vld [vmem:[%s168 + $0x38] sm:$0xff]
        %v203 = vld [vmem:[%s168 + $0x40] sm:$0xff]
        %v204 = vld [vmem:[%s168 + $0x48] sm:$0xff]
        %v205 = vld [vmem:[%s168 + $0x50] sm:$0xff]
        %v206 = vld [vmem:[%s168 + $0x58] sm:$0xff]
        %v207 = vld [vmem:[%s168 + $0x60] sm:$0xff]
        %v208 = vld [vmem:[%s168 + $0x68] sm:$0xff]
        %v209 = vld [vmem:[%s168 + $0x70] sm:$0xff]
        %v210 = vld [vmem:[%s168 + $0x78] sm:$0xff]
        %v211 = vld [vmem:[%s168 + $0x80] sm:$0xff]
        %v212 = vld [vmem:[%s168 + $0x88] sm:$0xff]
        %v213 = vld [vmem:[%s168 + $0x90] sm:$0xff]
        %v214 = vld [vmem:[%s168 + $0x98] sm:$0xff]
        %v215 = vld [vmem:[%s168 + $0xa0] sm:$0xff]
        %v216 = vld [vmem:[%s168 + $0xa8] sm:$0xff]
        %v217 = vld [vmem:[%s168 + $0xb0] sm:$0xff]
        %v218 = vld [vmem:[%s168 + $0xb8] sm:$0xff]
        %v219 = vld [vmem:[%s168 + $0xc0] sm:$0xff]
        %v220 = vld [vmem:[%s168 + $0xc8] sm:$0xff]
        %v221 = vld [vmem:[%s168 + $0xd0] sm:$0xff]
        %v222 = vld [vmem:[%s168 + $0xd8] sm:$0xff]
        %v223 = vld [vmem:[%s168 + $0xe0] sm:$0xff]
        %v224 = vld [vmem:[%s168 + $0xe8] sm:$0xff]
        %v225 = vld [vmem:[%s168 + $0xf0] sm:$0xff]
        %v226 = vld [vmem:[%s168 + $0xf8] sm:$0xff]
        %v227 = vld [vmem:[%s168 + $0x100] sm:$0xff]
        %v228 = vld [vmem:[%s168 + $0x108] sm:$0xff]
        %v229 = vld [vmem:[%s168 + $0x110] sm:$0xff]
        %v230 = vld [vmem:[%s168 + $0x118] sm:$0xff]
        %v231 = vld [vmem:[%s168 + $0x120] sm:$0xff]
        %v232 = vld [vmem:[%s168 + $0x128] sm:$0xff]
        %v233 = vld [vmem:[%s168 + $0x130] sm:$0xff]
        %v234 = vld [vmem:[%s168 + $0x138] sm:$0xff]
        %v235 = vld [vmem:[%s168 + $0x140] sm:$0xff]
        %v236 = vld [vmem:[%s168 + $0x148] sm:$0xff]
        %v237 = vld [vmem:[%s168 + $0x150] sm:$0xff]
        %v238 = vld [vmem:[%s168 + $0x158] sm:$0xff]
        %v239 = vld [vmem:[%s168 + $0x160] sm:$0xff]
        %v240 = vld [vmem:[%s168 + $0x168] sm:$0xff]
        %v241 = vld [vmem:[%s168 + $0x170] sm:$0xff]
        %v242 = vld [vmem:[%s168 + $0x178] sm:$0xff]
        %v243 = vld [vmem:[%s168 + $0x180] sm:$0xff]
        %v244 = vld [vmem:[%s168 + $0x188] sm:$0xff]
        %v245 = vld [vmem:[%s168 + $0x190] sm:$0xff]
        %v246 = vld [vmem:[%s168 + $0x198] sm:$0xff]
        %v247 = vld [vmem:[%s168 + $0x1a0] sm:$0xff]
        %v248 = vld [vmem:[%s168 + $0x1a8] sm:$0xff]
        %v249 = vld [vmem:[%s168 + $0x1b0] sm:$0xff]
        %v250 = vld [vmem:[%s168 + $0x1b8] sm:$0xff]
        %v251 = vld [vmem:[%s168 + $0x1c0] sm:$0xff]
        %v252 = vld [vmem:[%s168 + $0x1c8] sm:$0xff]
        %v253 = vld [vmem:[%s168 + $0x1d0] sm:$0xff]
        %v254 = vld [vmem:[%s168 + $0x1d8] sm:$0xff]
        %v255 = vld [vmem:[%s168 + $0x1e0] sm:$0xff]
        %v256 = vld [vmem:[%s168 + $0x1e8] sm:$0xff]
        %v257 = vld [vmem:[%s168 + $0x1f0] sm:$0xff]
        %v258 = vld [vmem:[%s168 + $0x1f8] sm:$0xff]
        %v259 = vstv %s193
        %v260 = vmul.f32 %v259, %v195
        %v261 = vmul.f32 %v259, %v196
        %v262 = vmul.f32 %v259, %v197
        %v263 = vmul.f32 %v259, %v198
        %v264 = vmul.f32 %v259, %v199
        %v265 = vmul.f32 %v259, %v200
        %v266 = vmul.f32 %v259, %v201
        %v267 = vmul.f32 %v259, %v202
        %v268 = vmul.f32 %v259, %v203
        %v269 = vmul.f32 %v259, %v204
        %v270 = vmul.f32 %v259, %v205
        %v271 = vmul.f32 %v259, %v206
        %v272 = vmul.f32 %v259, %v207
        %v273 = vmul.f32 %v259, %v208
        %v274 = vmul.f32 %v259, %v209
        %v275 = vmul.f32 %v259, %v210
        %v276 = vmul.f32 %v259, %v211
        %v277 = vmul.f32 %v259, %v212
        %v278 = vmul.f32 %v259, %v213
        %v279 = vmul.f32 %v259, %v214
        %v280 = vmul.f32 %v259, %v215
        %v281 = vmul.f32 %v259, %v216
        %v282 = vmul.f32 %v259, %v217
        %v283 = vmul.f32 %v259, %v218
        %v284 = vmul.f32 %v259, %v219
        %v285 = vmul.f32 %v259, %v220
        %v286 = vmul.f32 %v259, %v221
        %v287 = vmul.f32 %v259, %v222
        %v288 = vmul.f32 %v259, %v223
        %v289 = vmul.f32 %v259, %v224
        %v290 = vmul.f32 %v259, %v225
        %v291 = vmul.f32 %v259, %v226
        %v292 = vmul.f32 %v259, %v227
        %v293 = vmul.f32 %v259, %v228
        %v294 = vmul.f32 %v259, %v229
        %v295 = vmul.f32 %v259, %v230
        %v296 = vmul.f32 %v259, %v231
        %v297 = vmul.f32 %v259, %v232
        %v298 = vmul.f32 %v259, %v233
        %v299 = vmul.f32 %v259, %v234
        %v300 = vmul.f32 %v259, %v235
        %v301 = vmul.f32 %v259, %v236
        %v302 = vmul.f32 %v259, %v237
        %v303 = vmul.f32 %v259, %v238
        %v304 = vmul.f32 %v259, %v239
        %v305 = vmul.f32 %v259, %v240
        %v306 = vmul.f32 %v259, %v241
        %v307 = vmul.f32 %v259, %v242
        %v308 = vmul.f32 %v259, %v243
        %v309 = vmul.f32 %v259, %v244
        %v310 = vmul.f32 %v259, %v245
        %v311 = vmul.f32 %v259, %v246
        %v312 = vmul.f32 %v259, %v247
        %v313 = vmul.f32 %v259, %v248
        %v314 = vmul.f32 %v259, %v249
        %v315 = vmul.f32 %v259, %v250
        %v316 = vmul.f32 %v259, %v251
        %v317 = vmul.f32 %v259, %v252
        %v318 = vmul.f32 %v259, %v253
        %v319 = vmul.f32 %v259, %v254
        %v320 = vmul.f32 %v259, %v255
        %v321 = vmul.f32 %v259, %v256
        %v322 = vmul.f32 %v259, %v257
        %v323 = vmul.f32 %v259, %v258
        %v324 = vstv %s194
        %v325 = vadd.f32 %v260, %v324
        %v326 = vadd.f32 %v261, %v324
        %v327 = vadd.f32 %v262, %v324
        %v328 = vadd.f32 %v263, %v324
        %v329 = vadd.f32 %v264, %v324
        %v330 = vadd.f32 %v265, %v324
        %v331 = vadd.f32 %v266, %v324
        %v332 = vadd.f32 %v267, %v324
        %v333 = vadd.f32 %v268, %v324
        %v334 = vadd.f32 %v269, %v324
        %v335 = vadd.f32 %v270, %v324
        %v336 = vadd.f32 %v271, %v324
        %v337 = vadd.f32 %v272, %v324
        %v338 = vadd.f32 %v273, %v324
        %v339 = vadd.f32 %v274, %v324
        %v340 = vadd.f32 %v275, %v324
        %v341 = vadd.f32 %v276, %v324
        %v342 = vadd.f32 %v277, %v324
        %v343 = vadd.f32 %v278, %v324
        %v344 = vadd.f32 %v279, %v324
        %v345 = vadd.f32 %v280, %v324
        %v346 = vadd.f32 %v281, %v324
        %v347 = vadd.f32 %v282, %v324
        %v348 = vadd.f32 %v283, %v324
        %v349 = vadd.f32 %v284, %v324
        %v350 = vadd.f32 %v285, %v324
        %v351 = vadd.f32 %v286, %v324
        %v352 = vadd.f32 %v287, %v324
        %v353 = vadd.f32 %v288, %v324
        %v354 = vadd.f32 %v289, %v324
        %v355 = vadd.f32 %v290, %v324
        %v356 = vadd.f32 %v291, %v324
        %v357 = vadd.f32 %v292, %v324
        %v358 = vadd.f32 %v293, %v324
        %v359 = vadd.f32 %v294, %v324
        %v360 = vadd.f32 %v295, %v324
        %v361 = vadd.f32 %v296, %v324
        %v362 = vadd.f32 %v297, %v324
        %v363 = vadd.f32 %v298, %v324
        %v364 = vadd.f32 %v299, %v324
        %v365 = vadd.f32 %v300, %v324
        %v366 = vadd.f32 %v301, %v324
        %v367 = vadd.f32 %v302, %v324
        %v368 = vadd.f32 %v303, %v324
        %v369 = vadd.f32 %v304, %v324
        %v370 = vadd.f32 %v305, %v324
        %v371 = vadd.f32 %v306, %v324
        %v372 = vadd.f32 %v307, %v324
        %v373 = vadd.f32 %v308, %v324
        %v374 = vadd.f32 %v309, %v324
        %v375 = vadd.f32 %v310, %v324
        %v376 = vadd.f32 %v311, %v324
        %v377 = vadd.f32 %v312, %v324
        %v378 = vadd.f32 %v313, %v324
        %v379 = vadd.f32 %v314, %v324
        %v380 = vadd.f32 %v315, %v324
        %v381 = vadd.f32 %v316, %v324
        %v382 = vadd.f32 %v317, %v324
        %v383 = vadd.f32 %v318, %v324
        %v384 = vadd.f32 %v319, %v324
        %v385 = vadd.f32 %v320, %v324
        %v386 = vadd.f32 %v321, %v324
        %v387 = vadd.f32 %v322, %v324
        %v388 = vadd.f32 %v323, %v324
        %389 = vst [vmem:[%s190] sm:$0xff] %v325
        %390 = vst [vmem:[%s190 + $0x8] sm:$0xff] %v326
        %391 = vst [vmem:[%s190 + $0x10] sm:$0xff] %v327
        %392 = vst [vmem:[%s190 + $0x18] sm:$0xff] %v328
        %393 = vst [vmem:[%s190 + $0x20] sm:$0xff] %v329
        %394 = vst [vmem:[%s190 + $0x28] sm:$0xff] %v330
        %395 = vst [vmem:[%s190 + $0x30] sm:$0xff] %v331
        %396 = vst [vmem:[%s190 + $0x38] sm:$0xff] %v332
        %397 = vst [vmem:[%s190 + $0x40] sm:$0xff] %v333
        %398 = vst [vmem:[%s190 + $0x48] sm:$0xff] %v334
        %399 = vst [vmem:[%s190 + $0x50] sm:$0xff] %v335
        %400 = vst [vmem:[%s190 + $0x58] sm:$0xff] %v336
        %401 = vst [vmem:[%s190 + $0x60] sm:$0xff] %v337
        %402 = vst [vmem:[%s190 + $0x68] sm:$0xff] %v338
        %403 = vst [vmem:[%s190 + $0x70] sm:$0xff] %v339
        %404 = vst [vmem:[%s190 + $0x78] sm:$0xff] %v340
        %405 = vst [vmem:[%s190 + $0x80] sm:$0xff] %v341
        %406 = vst [vmem:[%s190 + $0x88] sm:$0xff] %v342
        %407 = vst [vmem:[%s190 + $0x90] sm:$0xff] %v343
        %408 = vst [vmem:[%s190 + $0x98] sm:$0xff] %v344
        %409 = vst [vmem:[%s190 + $0xa0] sm:$0xff] %v345
        %410 = vst [vmem:[%s190 + $0xa8] sm:$0xff] %v346
        %411 = vst [vmem:[%s190 + $0xb0] sm:$0xff] %v347
        %412 = vst [vmem:[%s190 + $0xb8] sm:$0xff] %v348
        %413 = vst [vmem:[%s190 + $0xc0] sm:$0xff] %v349
        %414 = vst [vmem:[%s190 + $0xc8] sm:$0xff] %v350
        %415 = vst [vmem:[%s190 + $0xd0] sm:$0xff] %v351
        %416 = vst [vmem:[%s190 + $0xd8] sm:$0xff] %v352
        %417 = vst [vmem:[%s190 + $0xe0] sm:$0xff] %v353
        %418 = vst [vmem:[%s190 + $0xe8] sm:$0xff] %v354
        %419 = vst [vmem:[%s190 + $0xf0] sm:$0xff] %v355
        %420 = vst [vmem:[%s190 + $0xf8] sm:$0xff] %v356
        %421 = vst [vmem:[%s190 + $0x100] sm:$0xff] %v357
        %422 = vst [vmem:[%s190 + $0x108] sm:$0xff] %v358
        %423 = vst [vmem:[%s190 + $0x110] sm:$0xff] %v359
        %424 = vst [vmem:[%s190 + $0x118] sm:$0xff] %v360
        %425 = vst [vmem:[%s190 + $0x120] sm:$0xff] %v361
        %426 = vst [vmem:[%s190 + $0x128] sm:$0xff] %v362
        %427 = vst [vmem:[%s190 + $0x130] sm:$0xff] %v363
        %428 = vst [vmem:[%s190 + $0x138] sm:$0xff] %v364
        %429 = vst [vmem:[%s190 + $0x140] sm:$0xff] %v365
        %430 = vst [vmem:[%s190 + $0x148] sm:$0xff] %v366
        %431 = vst [vmem:[%s190 + $0x150] sm:$0xff] %v367
        %432 = vst [vmem:[%s190 + $0x158] sm:$0xff] %v368
        %433 = vst [vmem:[%s190 + $0x160] sm:$0xff] %v369
        %434 = vst [vmem:[%s190 + $0x168] sm:$0xff] %v370
        %435 = vst [vmem:[%s190 + $0x170] sm:$0xff] %v371
        %436 = vst [vmem:[%s190 + $0x178] sm:$0xff] %v372
        %437 = vst [vmem:[%s190 + $0x180] sm:$0xff] %v373
        %438 = vst [vmem:[%s190 + $0x188] sm:$0xff] %v374
        %439 = vst [vmem:[%s190 + $0x190] sm:$0xff] %v375
        %440 = vst [vmem:[%s190 + $0x198] sm:$0xff] %v376
        %441 = vst [vmem:[%s190 + $0x1a0] sm:$0xff] %v377
        %442 = vst [vmem:[%s190 + $0x1a8] sm:$0xff] %v378
        %443 = vst [vmem:[%s190 + $0x1b0] sm:$0xff] %v379
        %444 = vst [vmem:[%s190 + $0x1b8] sm:$0xff] %v380
        %445 = vst [vmem:[%s190 + $0x1c0] sm:$0xff] %v381
        %446 = vst [vmem:[%s190 + $0x1c8] sm:$0xff] %v382
        %447 = vst [vmem:[%s190 + $0x1d0] sm:$0xff] %v383
        %448 = vst [vmem:[%s190 + $0x1d8] sm:$0xff] %v384
        %449 = vst [vmem:[%s190 + $0x1e0] sm:$0xff] %v385
        %450 = vst [vmem:[%s190 + $0x1e8] sm:$0xff] %v386
        %451 = vst [vmem:[%s190 + $0x1f0] sm:$0xff] %v387
        %452 = vst [vmem:[%s190 + $0x1f8] sm:$0xff] %v388
        %s453 = sand.u32 %s98, 1
        %s454 = scalar_lea.sflag [#allocation6], %s453
        %s455 = sand.u32 %s98, 1
        %s456 = smul.addr %s455, 512
        %s457 = scalar_lea.vmem [#allocation7], %s456
        // Predicated region
        $region37: #{tpu_custom_call.1} parent=31 // pred_check
          %p458 = pneg %p108
        $region38: #{tpu_custom_call.1} parent=31 // pred_check_branch
          %460 = sbr.rel (%p458) target = $region40
        $region39: #{tpu_custom_call.1} parent=31 // pred_region
          %s461 = smul.u32 64, %s22
          %s463 = ssub.s32 8192, 8192
          %464 = vsyncadd %s454, %s463
          %s465 = smul.addr %s461, 128
          %s466 = scalar_lea.hbm %s3, %s465
          %s467 = sshll.u32 %s457, 4
          %s468 = int_to_ptr.vmem [resolvable:$true] %s467
          %473 = dma.vmem_to_hbm [thread:$0]  %s468, 8192, %s466, %s454, 128, 128, 8
        $region40: #{tpu_custom_call.1} parent=31 // pred_fallthru
          _
      $region32: #{tpu_custom_call.1} parent=5 // pred_fallthru
        _
      %p474 = scmp.le.s32.totalorder 2, %s17
      // Predicated region
      $region41: #{tpu_custom_call.1} parent=5 // pred_check
        %p475 = pneg %p474
      $region42: #{tpu_custom_call.1} parent=5 // pred_check_branch
        %477 = sbr.rel (%p475) target = $region44
      $region43: #{tpu_custom_call.1} parent=5 // pred_region
        %s478 = ssub.s32 %s17, 2
        // Predicated region
        $region45: #{tpu_custom_call.1} parent=43 // pred_check
          %p479 = pneg %p114
        $region46: #{tpu_custom_call.1} parent=43 // pred_check_branch
          %481 = sbr.rel (%p479) target = $region48
        $region47: #{tpu_custom_call.1} parent=43 // pred_region
          %s482 = sand.u32 %s99, 1
          %s483 = scalar_lea.sflag [#allocation6], %s482
          %s484 = sand.u32 %s99, 1
          %s485 = smul.addr %s484, 512
          %s486 = scalar_lea.vmem [#allocation7], %s485
          %487 = dma.done %s483, 8192
        $region48: #{tpu_custom_call.1} parent=43 // pred_fallthru
          _
      $region44: #{tpu_custom_call.1} parent=5 // pred_fallthru
        _
    $region6: #{tpu_custom_call.1} parent=1 // loop_footer
      %s21 = sadd.s32 1, %s17
    $region7: #{tpu_custom_call.1} parent=1 // loop_footer_branch
      %16 = sbr.rel target = $region3
    $region8: #{tpu_custom_call.1} parent=1 // loop_exit
      _
    %488 = vsyncpa [#allocation5], 1
    %s489 = scalar_lea.sflag [#allocation5], 1
    %490 = vsyncpa %s489, 1
    %491 = vsyncpa [#allocation6], 1
    %s492 = scalar_lea.sflag [#allocation6], 1
    %493 = vsyncpa %s492, 1

</llo_original>
